<compile_context>
chip_gen: v7x
topology: tpu7x:2x2x1
jax: 0.10.0
libtpu: 0.0.40
codegen_flags: <defaults>
</compile_context>

<pallas_src>
import functools

import jax
import jax.numpy as jnp
from jax.experimental import pallas as pl
from jax.experimental.pallas import tpu as pltpu


def params_equation_kernel(params_ref, feat_ref, out_ref):
    # params_ref: (2,) f32 in SMEM
    # feat_ref:   (3, tile_rows, 128) f32 in VMEM  (N folded into sublanes+lanes)
    # out_ref:    (tile_rows, 128) f32 in VMEM
    p0 = params_ref[0]
    p1 = params_ref[1]
    f0 = feat_ref[0]      # features[:, 0]  (tile_rows, 128)
    f1 = feat_ref[1]      # features[:, 1]
    f2 = feat_ref[2]      # features[:, 2]
    out_ref[...] = p0 * f1 + p1 * f2 + f0


@functools.partial(jax.jit, static_argnames=("rows_tile",))
def params_equation_forward(features, params, *, rows_tile=4096):
    """features: (N, F>=3) f32, params: (2, 1) f32 -> (N, 1) f32."""
    N, F = features.shape
    assert F >= 3, "forward slices features[:, 0:3]"
    assert rows_tile % 8 == 0, "rows_tile must be a multiple of 8 (sublane width)"

    # Fold N into (rows, 128): pad N to a multiple of 8*128 so `rows` is a
    # multiple of 8 and every vreg / (8,128) VMEM tile is fully dense.
    n_pad = pl.cdiv(N, 8 * 128) * (8 * 128)
    rows = n_pad // 128
    tile_rows = min(rows_tile, rows)      # both are multiples of 8
    grid = pl.cdiv(rows, tile_rows)       # partial last block is masked by Pallas

    # TODO(synk): ideally the upstream producer emits features already in this
    # (3, rows, 128) layout (or this FMA is fused into the producing kernel);
    # under jit the slice+transpose+pad+reshape below fuse into one XLA copy.
    x = features[:, :3].astype(jnp.float32).T             # (3, N)
    x = jnp.pad(x, ((0, 0), (0, n_pad - N)))               # (3, n_pad)
    x = x.reshape(3, rows, 128)                             # free row-major reshape

    p = params.reshape(2).astype(jnp.float32)               # (2,) scalars -> SMEM

    out = pl.pallas_call(
        params_equation_kernel,
        out_shape=jax.ShapeDtypeStruct((rows, 128), jnp.float32),
        grid=(grid,),
        in_specs=[
            pl.BlockSpec(memory_space=pltpu.MemorySpace.SMEM),       # params (2,)
            pl.BlockSpec((3, tile_rows, 128), lambda i: (0, i, 0)),   # features
        ],
        out_specs=pl.BlockSpec((tile_rows, 128), lambda i: (i, 0)),
        compiler_params=pltpu.CompilerParams(
            dimension_semantics=("parallel",),
            vmem_limit_bytes=40 << 20,   # > ~16 MiB working set; fits v5e/v6e/v7x
        ),
    )(p, x)

    return out.reshape(n_pad)[:N].reshape(N, 1)


if __name__ == "__main__":
    key = jax.random.PRNGKey(0)
    k_feat, k_par, k_feat2 = jax.random.split(key, 3)

    # --- small case (single tile, N=8 padded to one dense (8,128) slab) ---
    N, F = 8, 5
    features = jax.random.normal(k_feat, (N, F), dtype=jnp.float32)
    # Module __init__ uses zeros((2,1)); use nonzero values so the FMA path is exercised.
    params = jax.random.normal(k_par, (2, 1), dtype=jnp.float32)

    out = params_equation_forward(features, params)
    out = jax.block_until_ready(out)

    ref = features[:, 1:3] @ params + features[:, 0:1]
    assert out.shape == (N, 1)
    assert jnp.allclose(out, ref, atol=1e-5, rtol=1e-5), "mismatch vs reference (small)"

    # --- multi-tile case: grid > 1 with a partial (masked) last block ---
    N2 = 2500                                  # rows = 24, tile_rows = 16 -> grid = 2
    features2 = jax.random.normal(k_feat2, (N2, F), dtype=jnp.float32)
    out2 = params_equation_forward(features2, params, rows_tile=16)
    out2 = jax.block_until_ready(out2)
    ref2 = features2[:, 1:3] @ params + features2[:, 0:1]
    assert out2.shape == (N2, 1)
    assert jnp.allclose(out2, ref2, atol=1e-5, rtol=1e-5), "mismatch vs reference (tiled)"

    print("KERNEL_OK")
</pallas_src>

<mosaic_0001>
module attributes {stable_mosaic.version = 11 : i64} {
  func.func @params_equation_kernel(%arg0: i32, %arg1: memref<2xf32, #tpu.memory_space<smem>>, %arg2: memref<3x8x128xf32, #tpu.memory_space<vmem>>, %arg3: memref<8x128xf32, #tpu.memory_space<vmem>>) attributes {dimension_semantics = [#tpu.dimension_semantics<parallel>], iteration_bounds = array<i64: 1>, scalar_prefetch = 0 : i64, scratch_operands = 0 : i64, tpu.core_type = #tpu.core_type<tc>, window_params = [{transform_indices = @transform_0, window_bounds = array<i64: 2>}, {transform_indices = @transform_1, window_bounds = array<i64: 3, 8, 128>}, {transform_indices = @transform_2, window_bounds = array<i64: 8, 128>}]} {
    %c0 = arith.constant 0 : index
    %0 = memref.load %arg1[%c0] : memref<2xf32, #tpu.memory_space<smem>>
    %c1 = arith.constant 1 : index
    %1 = memref.load %arg1[%c1] : memref<2xf32, #tpu.memory_space<smem>>
    %c0_0 = arith.constant 0 : index
    %c0_1 = arith.constant 0 : index
    %c0_2 = arith.constant 0 : index
    %2 = vector.load %arg2[%c0_0, %c0_1, %c0_2] : memref<3x8x128xf32, #tpu.memory_space<vmem>>, vector<1x8x128xf32>
    %3 = vector.shape_cast %2 : vector<1x8x128xf32> to vector<8x128xf32>
    %c1_3 = arith.constant 1 : index
    %c0_4 = arith.constant 0 : index
    %c0_5 = arith.constant 0 : index
    %4 = vector.load %arg2[%c1_3, %c0_4, %c0_5] : memref<3x8x128xf32, #tpu.memory_space<vmem>>, vector<1x8x128xf32>
    %5 = vector.shape_cast %4 : vector<1x8x128xf32> to vector<8x128xf32>
    %c2 = arith.constant 2 : index
    %c0_6 = arith.constant 0 : index
    %c0_7 = arith.constant 0 : index
    %6 = vector.load %arg2[%c2, %c0_6, %c0_7] : memref<3x8x128xf32, #tpu.memory_space<vmem>>, vector<1x8x128xf32>
    %7 = vector.shape_cast %6 : vector<1x8x128xf32> to vector<8x128xf32>
    %8 = vector.broadcast %0 : f32 to vector<8x128xf32>
    %9 = arith.mulf %8, %5 : vector<8x128xf32>
    %10 = vector.broadcast %1 : f32 to vector<8x128xf32>
    %11 = arith.mulf %10, %7 : vector<8x128xf32>
    %12 = arith.addf %9, %11 : vector<8x128xf32>
    %13 = arith.addf %12, %3 : vector<8x128xf32>
    %c0_8 = arith.constant 0 : index
    %c0_9 = arith.constant 0 : index
    %14 = vector.load %arg3[%c0_8, %c0_9] : memref<8x128xf32, #tpu.memory_space<vmem>>, vector<8x128xf32>
    tpu.vector_store %arg3[%c0_8, %c0_9], %13 {strides = array<i32>} : memref<8x128xf32, #tpu.memory_space<vmem>>, vector<8x128xf32>,
    return
  }
  func.func @transform_0(%arg0: i32) -> i32 {
    %c0_i32 = arith.constant 0 : i32
    %c0_i32_0 = arith.constant 0 : i32
    return %c0_i32 : i32
  }
  func.func @transform_1(%arg0: i32) -> (i32, i32, i32) {
    %c0_i32 = arith.constant 0 : i32
    %c0_i32_0 = arith.constant 0 : i32
    %c0_i32_1 = arith.constant 0 : i32
    return %c0_i32, %arg0, %c0_i32_0 : i32, i32, i32
  }
  func.func @transform_2(%arg0: i32) -> (i32, i32) {
    %c0_i32 = arith.constant 0 : i32
    %c0_i32_0 = arith.constant 0 : i32
    return %arg0, %c0_i32 : i32, i32
  }
}

</mosaic_0001>

<llo_original>
// kernel: params_equation_forward.1
$region0: #{params_equation_forward.1}
  #allocation0 [shape = 'u32[]', space=smem, size = 0x4, offset = 0x4, fixed_abs, tag = 'smem constant byte address 0x4 - core index']
  #allocation1 [shape = 'u32[144,128]{1,0:T(1,128)}', space=vmem, size = 0x12000, scoped, tag = 'internal scratch']
  %s0 = inlined_call_operand.vmem [shape: f32[2], index: 0, kind: input, shape index: {}]
  %s1 = inlined_call_operand.vmem [shape: f32[3,8,128], index: 1, kind: input, shape index: {}]
  %s2 = inlined_call_operand.vmem [shape: f32[8,128], index: 2, kind: output, shape index: {}]
  %s3 = sld [smem:[#allocation0]]
  $region22: #{params_equation_forward.1} parent=0
    _
  %s5 = ssub.s32 1, %s3
  %s6 = scalar_select 0, %s5, %s3
  $region1: #{params_equation_forward.1} parent=0
    #allocation2 [shape = 'u8[512]{0}', space=smem, size = 0x200, scoped, tag = 'input window, operand 0, single buffered']
    #allocation3 [shape = 's32[1]{0}', space=sflag, size = 0x4, scoped, tag = 'scoped memory for params_equation_forward.1']
    %7 = vsyncpa [#allocation3], 0
    // Predicated region
    $region2: #{params_equation_forward.1} parent=1 // pred_check
      _
    $region3: #{params_equation_forward.1} parent=1 // pred_check_branch
      %9 = sbr.rel (0) target = $region5
    $region4: #{params_equation_forward.1} parent=1 // pred_region
      %s11 = ssub.s32 16, 16
      %12 = vsyncadd [#allocation3], %s11
      %s14 = sshll.u32 %s0, 4
      %s15 = int_to_ptr.vmem [resolvable:$true] %s14
      %17 = dma.vmem_to_smem %s15, 16, [#allocation2], [#allocation3]
    $region5: #{params_equation_forward.1} parent=1 // pred_fallthru
      _
    // Predicated region
    $region6: #{params_equation_forward.1} parent=1 // pred_check
      _
    $region7: #{params_equation_forward.1} parent=1 // pred_check_branch
      %19 = sbr.rel (0) target = $region9
    $region8: #{params_equation_forward.1} parent=1 // pred_region
      _
    $region9: #{params_equation_forward.1} parent=1 // pred_fallthru
      _
    // Predicated region
    $region10: #{params_equation_forward.1} parent=1 // pred_check
      _
    $region11: #{params_equation_forward.1} parent=1 // pred_check_branch
      %21 = sbr.rel (0) target = $region13
    $region12: #{params_equation_forward.1} parent=1 // pred_region
      %22 = dma.done [#allocation3], 16
    $region13: #{params_equation_forward.1} parent=1 // pred_fallthru
      _
    %23 = sfence
    %s24 = sld [smem:[#allocation2]]
    %s25 = sld [smem:[#allocation2 + $0x1]]
    %v26 = vld [vmem:[%s1] sm:$0xff]
    %s27 = scalar_lea.vmem %s1, 8
    %v28 = vld [vmem:[%s27] sm:$0xff]
    %s29 = scalar_lea.vmem %s1, 16
    %v30 = vld [vmem:[%s29] sm:$0xff]
    %v31 = vstv %s24
    %v32 = vmul.f32 %v31, %v28
    %v33 = vstv %s25
    %v34 = vmul.f32 %v33, %v30
    %v35 = vadd.f32 %v32, %v34
    %v36 = vadd.f32 %v35, %v26
    %37 = vst [vmem:[%s2] sm:$0xff] %v36
    // Predicated region
    $region14: #{params_equation_forward.1} parent=1 // pred_check
      _
    $region15: #{params_equation_forward.1} parent=1 // pred_check_branch
      %39 = sbr.rel (0) target = $region17
    $region16: #{params_equation_forward.1} parent=1 // pred_region
      _
    $region17: #{params_equation_forward.1} parent=1 // pred_fallthru
      _
    // Predicated region
    $region18: #{params_equation_forward.1} parent=1 // pred_check
      _
    $region19: #{params_equation_forward.1} parent=1 // pred_check_branch
      %41 = sbr.rel (0) target = $region21
    $region20: #{params_equation_forward.1} parent=1 // pred_region
      _
    $region21: #{params_equation_forward.1} parent=1 // pred_fallthru
      _
    %42 = vsyncpa [#allocation3], 1

</llo_original>
